<compile_context>
chip_gen: v7x
topology: tpu7x:2x2x1
jax: 0.10.0
libtpu: 0.0.40
codegen_flags: <defaults>
</compile_context>

<pallas_src>
import jax
import jax.numpy as jnp
from jax.experimental import pallas as pl
from jax.experimental.pallas import tpu as pltpu


def _uwl_kernel(det_ref, seg_ref, cls_ref, log_vars_ref, out_ref):
    # det_ref/seg_ref/cls_ref: SMEM (1,) f32; log_vars_ref: SMEM (3,) f32.
    # out_ref: VMEM (1, 1) f32.
    lv0 = log_vars_ref[0]
    lv1 = log_vars_ref[1]
    lv2 = log_vars_ref[2]
    det = det_ref[0]
    seg = seg_ref[0]
    cls = cls_ref[0]

    # Scalar-ALU sum of the regularizer terms.
    lv_sum = lv0 + lv1 + lv2

    # exp() needs the EUP (vector unit): splat each scalar to a (1,1) tile,
    # apply exp, scale by the (scalar) task loss.  No reductions, no XLU.
    def weighted(lv, loss):
        return jnp.exp(jnp.full((1, 1), -lv, dtype=jnp.float32)) * loss

    out_ref[...] = (weighted(lv0, det)
                    + weighted(lv1, seg)
                    + weighted(lv2, cls)
                    + lv_sum)


def _uwl_forward_pallas(det_loss, seg_loss, cls_loss, log_vars):
    det = jnp.asarray(det_loss, jnp.float32).reshape(1)
    seg = jnp.asarray(seg_loss, jnp.float32).reshape(1)
    cls = jnp.asarray(cls_loss, jnp.float32).reshape(1)
    lv = jnp.asarray(log_vars, jnp.float32)  # (3,), passed through untouched

    smem = pl.BlockSpec(memory_space=pltpu.MemorySpace.SMEM)
    out = pl.pallas_call(
        _uwl_kernel,
        out_shape=jax.ShapeDtypeStruct((1, 1), jnp.float32),
        in_specs=[smem, smem, smem, smem],
        out_specs=pl.BlockSpec(memory_space=pltpu.MemorySpace.VMEM),
    )(det, seg, cls, lv)
    return out[0, 0]


@jax.custom_vjp
def uncertainty_weighted_loss(det_loss, seg_loss, cls_loss, log_vars):
    """Forward pass of UncertaintyWeightedLoss via a Pallas TPU kernel."""
    return _uwl_forward_pallas(det_loss, seg_loss, cls_loss, log_vars)


def _uwl_fwd(det_loss, seg_loss, cls_loss, log_vars):
    out = _uwl_forward_pallas(det_loss, seg_loss, cls_loss, log_vars)
    res = (jnp.asarray(det_loss, jnp.float32),
           jnp.asarray(seg_loss, jnp.float32),
           jnp.asarray(cls_loss, jnp.float32),
           jnp.asarray(log_vars, jnp.float32))
    return out, res


def _uwl_bwd(res, g):
    det, seg, cls, lv = res
    p = jnp.exp(-lv)                                   # (3,) precisions
    losses = jnp.stack([det, seg, cls])                # (3,)
    d_losses = g * p                                   # dL/dloss_i = exp(-lv_i)
    d_lv = g * (1.0 - p * losses)                      # dL/dlv_i = 1 - exp(-lv_i)*loss_i
    return d_losses[0], d_losses[1], d_losses[2], d_lv


uncertainty_weighted_loss.defvjp(_uwl_fwd, _uwl_bwd)


if __name__ == "__main__":
    key = jax.random.PRNGKey(0)
    k_det, k_seg, k_cls = jax.random.split(key, 3)

    # Deterministic synthetic scalar task losses (non-negative, like real losses).
    det_loss = jnp.abs(jax.random.normal(k_det, (), dtype=jnp.float32))
    seg_loss = jnp.abs(jax.random.normal(k_seg, (), dtype=jnp.float32))
    cls_loss = jnp.abs(jax.random.normal(k_cls, (), dtype=jnp.float32))

    # Parameter init exactly as in the module's __init__: zeros(3).
    log_vars = jnp.zeros((3,), dtype=jnp.float32)

    result = uncertainty_weighted_loss(det_loss, seg_loss, cls_loss, log_vars)
    result = jax.block_until_ready(result)

    # Pure-JAX reference (same math as the PyTorch forward).
    def ref_fn(d, s, c, lv):
        return (jnp.exp(-lv[0]) * d + lv[0]
                + jnp.exp(-lv[1]) * s + lv[1]
                + jnp.exp(-lv[2]) * c + lv[2])

    ref = ref_fn(det_loss, seg_loss, cls_loss, log_vars)
    assert jnp.allclose(result, ref, rtol=1e-5, atol=1e-6), (result, ref)

    # Gradient-flow check: custom VJP must match autodiff of the reference.
    g_pallas = jax.grad(uncertainty_weighted_loss, argnums=(0, 1, 2, 3))(
        det_loss, seg_loss, cls_loss, log_vars)
    g_ref = jax.grad(ref_fn, argnums=(0, 1, 2, 3))(
        det_loss, seg_loss, cls_loss, log_vars)
    for ga, gb in zip(g_pallas, g_ref):
        assert jnp.allclose(ga, gb, rtol=1e-5, atol=1e-6), (ga, gb)

    print("KERNEL_OK")
</pallas_src>

<mosaic_0001>
module attributes {stable_mosaic.version = 11 : i64} {
  func.func @_uwl_kernel(%arg0: memref<1xf32, #tpu.memory_space<smem>>, %arg1: memref<1xf32, #tpu.memory_space<smem>>, %arg2: memref<1xf32, #tpu.memory_space<smem>>, %arg3: memref<3xf32, #tpu.memory_space<smem>>, %arg4: memref<1x1xf32, #tpu.memory_space<vmem>>) attributes {dimension_semantics = [], scalar_prefetch = 0 : i64, scratch_operands = 0 : i64, tpu.core_type = #tpu.core_type<tc>} {
    %c0 = arith.constant 0 : index
    %0 = memref.load %arg3[%c0] : memref<3xf32, #tpu.memory_space<smem>>
    %c1 = arith.constant 1 : index
    %1 = memref.load %arg3[%c1] : memref<3xf32, #tpu.memory_space<smem>>
    %c2 = arith.constant 2 : index
    %2 = memref.load %arg3[%c2] : memref<3xf32, #tpu.memory_space<smem>>
    %c0_0 = arith.constant 0 : index
    %3 = memref.load %arg0[%c0_0] : memref<1xf32, #tpu.memory_space<smem>>
    %c0_1 = arith.constant 0 : index
    %4 = memref.load %arg1[%c0_1] : memref<1xf32, #tpu.memory_space<smem>>
    %c0_2 = arith.constant 0 : index
    %5 = memref.load %arg2[%c0_2] : memref<1xf32, #tpu.memory_space<smem>>
    %6 = arith.addf %0, %1 : f32
    %7 = arith.addf %6, %2 : f32
    %cst = arith.constant 0.000000e+00 : f32
    %8 = arith.subf %cst, %0 : f32
    %9 = vector.broadcast %8 : f32 to vector<1x1xf32>
    %10 = math.exp %9 : vector<1x1xf32>
    %11 = vector.broadcast %3 : f32 to vector<1x1xf32>
    %12 = arith.mulf %10, %11 : vector<1x1xf32>
    %cst_3 = arith.constant 0.000000e+00 : f32
    %13 = arith.subf %cst_3, %1 : f32
    %14 = vector.broadcast %13 : f32 to vector<1x1xf32>
    %15 = math.exp %14 : vector<1x1xf32>
    %16 = vector.broadcast %4 : f32 to vector<1x1xf32>
    %17 = arith.mulf %15, %16 : vector<1x1xf32>
    %18 = arith.addf %12, %17 : vector<1x1xf32>
    %cst_4 = arith.constant 0.000000e+00 : f32
    %19 = arith.subf %cst_4, %2 : f32
    %20 = vector.broadcast %19 : f32 to vector<1x1xf32>
    %21 = math.exp %20 : vector<1x1xf32>
    %22 = vector.broadcast %5 : f32 to vector<1x1xf32>
    %23 = arith.mulf %21, %22 : vector<1x1xf32>
    %24 = arith.addf %18, %23 : vector<1x1xf32>
    %25 = vector.broadcast %7 : f32 to vector<1x1xf32>
    %26 = arith.addf %24, %25 : vector<1x1xf32>
    %c0_5 = arith.constant 0 : index
    %c0_6 = arith.constant 0 : index
    %27 = vector.load %arg4[%c0_5, %c0_6] : memref<1x1xf32, #tpu.memory_space<vmem>>, vector<1x1xf32>
    tpu.vector_store %arg4[%c0_5, %c0_6], %26 {strides = array<i32>} : memref<1x1xf32, #tpu.memory_space<vmem>>, vector<1x1xf32>,
    return
  }
}

</mosaic_0001>

<llo_original>
// kernel: tpu_custom_call.1
$region0: #{tpu_custom_call.1}
  #allocation0 [shape = 'u32[]', space=smem, size = 0x4, offset = 0x4, fixed_abs, tag = 'smem constant byte address 0x4 - core index']
  #allocation1 [shape = 'u32[144,128]{1,0:T(1,128)}', space=vmem, size = 0x12000, scoped, tag = 'internal scratch']
  #allocation2 [shape = 'f32[1]{0:T(128)S(6)}', space=smem, size = 0x200, scoped, tag = 'scoped memory for tpu_custom_call.1']
  #allocation3 [shape = 'f32[1]{0:T(128)S(6)}', space=smem, size = 0x200, scoped, tag = 'scoped memory for tpu_custom_call.1']
  #allocation4 [shape = 'f32[1]{0:T(128)S(6)}', space=smem, size = 0x200, scoped, tag = 'scoped memory for tpu_custom_call.1']
  %s0 = inlined_call_operand.<no memory space> [shape: f32[1], index: 0, kind: input, shape index: {}]
  %s1 = inlined_call_operand.<no memory space> [shape: f32[1], index: 1, kind: input, shape index: {}]
  %s2 = inlined_call_operand.<no memory space> [shape: f32[1], index: 2, kind: input, shape index: {}]
  %s3 = inlined_call_operand.vmem [shape: f32[3], index: 3, kind: input, shape index: {}]
  %s4 = inlined_call_operand.hbm [shape: f32[1,1], index: 4, kind: output, shape index: {}]
  %s5 = sld [smem:[#allocation0]]
  $region30: #{tpu_custom_call.1} parent=0
    _
  %s7 = ssub.s32 1, %s5
  %s8 = scalar_select 0, %s7, %s5
  %9 = sst [smem:[#allocation2]] %s0
  %10 = sst [smem:[#allocation3]] %s1
  %11 = sst [smem:[#allocation4]] %s2
  $region1: #{tpu_custom_call.1} parent=0
    #allocation5 [shape = 'u8[512]{0}', space=smem, size = 0x200, scoped, tag = 'input window, operand 3, single buffered']
    #allocation6 [shape = 's32[1]{0}', space=sflag, size = 0x4, scoped, tag = 'scoped memory for tpu_custom_call.1']
    #allocation7 [shape = 's32[1]{0}', space=sflag, size = 0x4, scoped, tag = 'scoped memory for tpu_custom_call.1']
    #allocation8 [shape = 'u8[512]{0}', space=vmem, size = 0x400, scoped, tag = 'output window, operand 0, single buffered']
    %12 = vsyncpa [#allocation7], 0
    %13 = vsyncpa [#allocation6], 0
    // Predicated region
    $region2: #{tpu_custom_call.1} parent=1 // pred_check
      _
    $region3: #{tpu_custom_call.1} parent=1 // pred_check_branch
      %15 = sbr.rel (0) target = $region5
    $region4: #{tpu_custom_call.1} parent=1 // pred_region
      _
    $region5: #{tpu_custom_call.1} parent=1 // pred_fallthru
      _
    // Predicated region
    $region6: #{tpu_custom_call.1} parent=1 // pred_check
      _
    $region7: #{tpu_custom_call.1} parent=1 // pred_check_branch
      %17 = sbr.rel (0) target = $region9
    $region8: #{tpu_custom_call.1} parent=1 // pred_region
      _
    $region9: #{tpu_custom_call.1} parent=1 // pred_fallthru
      _
    // Predicated region
    $region10: #{tpu_custom_call.1} parent=1 // pred_check
      _
    $region11: #{tpu_custom_call.1} parent=1 // pred_check_branch
      %19 = sbr.rel (0) target = $region13
    $region12: #{tpu_custom_call.1} parent=1 // pred_region
      _
    $region13: #{tpu_custom_call.1} parent=1 // pred_fallthru
      _
    // Predicated region
    $region14: #{tpu_custom_call.1} parent=1 // pred_check
      _
    $region15: #{tpu_custom_call.1} parent=1 // pred_check_branch
      %21 = sbr.rel (0) target = $region17
    $region16: #{tpu_custom_call.1} parent=1 // pred_region
      %s23 = ssub.s32 16, 16
      %24 = vsyncadd [#allocation7], %s23
      %s26 = sshll.u32 %s3, 4
      %s27 = int_to_ptr.vmem [resolvable:$true] %s26
      %29 = dma.vmem_to_smem %s27, 16, [#allocation5], [#allocation7]
    $region17: #{tpu_custom_call.1} parent=1 // pred_fallthru
      _
    // Predicated region
    $region18: #{tpu_custom_call.1} parent=1 // pred_check
      _
    $region19: #{tpu_custom_call.1} parent=1 // pred_check_branch
      %31 = sbr.rel (0) target = $region21
    $region20: #{tpu_custom_call.1} parent=1 // pred_region
      %32 = dma.done [#allocation7], 16
    $region21: #{tpu_custom_call.1} parent=1 // pred_fallthru
      _
    %33 = sfence
    %s34 = sld [smem:[#allocation5]]
    %s35 = sld [smem:[#allocation5 + $0x1]]
    %s36 = sld [smem:[#allocation5 + $0x2]]
    %s37 = sld [smem:[#allocation2]]
    %s38 = sld [smem:[#allocation3]]
    %s39 = sld [smem:[#allocation4]]
    %s40 = sadd.f32 %s34, %s35
    %s41 = sadd.f32 %s40, %s36
    %s42 = ssub.f32 0.0, %s34
    %v43 = vstv %s42
    %v44 = vmul.f32 %v43, 1.442695
    %v45 = vpow.pop %v44
    %v46 = vstv %s37
    %v47 = vmul.f32 %v45, %v46
    %s48 = ssub.f32 0.0, %s35
    %v49 = vstv %s48
    %v50 = vmul.f32 %v49, 1.442695
    %v51 = vpow.pop %v50
    %v52 = vstv %s38
    %v53 = vmul.f32 %v51, %v52
    %v54 = vadd.f32 %v47, %v53
    %s55 = ssub.f32 0.0, %s36
    %v56 = vstv %s55
    %v57 = vmul.f32 %v56, 1.442695
    %v58 = vpow.pop %v57
    %v59 = vstv %s39
    %v60 = vmul.f32 %v58, %v59
    %v61 = vadd.f32 %v54, %v60
    %v62 = vstv %s41
    %v63 = vadd.f32 %v61, %v62
    %vm64 = vcmask 0
    %65 = vst.msk [vmem:[#allocation8] sm:$0x1] %vm64, %v63
    // Predicated region
    $region22: #{tpu_custom_call.1} parent=1 // pred_check
      _
    $region23: #{tpu_custom_call.1} parent=1 // pred_check_branch
      %67 = sbr.rel (0) target = $region25
    $region24: #{tpu_custom_call.1} parent=1 // pred_region
      %s69 = ssub.s32 16, 16
      %70 = vsyncadd [#allocation6], %s69
      %s72 = sshll.u32 [#allocation8], 4
      %s73 = int_to_ptr.vmem [resolvable:$true] %s72
      %75 = dma.vmem_to_hbm [thread:$0]  %s73, 16, %s4, [#allocation6]
    $region25: #{tpu_custom_call.1} parent=1 // pred_fallthru
      _
    // Predicated region
    $region26: #{tpu_custom_call.1} parent=1 // pred_check
      _
    $region27: #{tpu_custom_call.1} parent=1 // pred_check_branch
      %77 = sbr.rel (0) target = $region29
    $region28: #{tpu_custom_call.1} parent=1 // pred_region
      %78 = dma.done [#allocation6], 16
    $region29: #{tpu_custom_call.1} parent=1 // pred_fallthru
      _
    %79 = vsyncpa [#allocation6], 1
    %80 = vsyncpa [#allocation7], 1

</llo_original>
